<compile_context>
chip_gen: v6e
topology: v6e:2x2x1
jax: 0.10.0
libtpu: 0.0.40
codegen_flags: <defaults>
</compile_context>

<pallas_src>
import jax
import jax.numpy as jnp
from jax.experimental import pallas as pl
from jax.experimental.pallas import tpu as pltpu


_ROWS_PER_ITER = 8  # static unroll: one (8, 128) vreg worth of rows per loop iter


def _gather_block_kernel(ids_ref, table_ref, out_ref):
    """One (T, D) output tile: out[r, :] = table[ids[base + r], :].

    ids_ref   : SMEM int32 [N_pad]  (scalar-prefetched, already +1 shifted/clipped)
    table_ref : VMEM [V, D]         (full table, resident across the whole grid)
    out_ref   : VMEM [T, D]         (dense output tile for this grid step)
    """
    t = out_ref.shape[0]
    base = pl.multiple_of(pl.program_id(0) * t, t)

    def body(j, carry):
        r0 = j * _ROWS_PER_ITER
        # Static unroll: 8 independent row copies for the LLO scheduler to
        # interleave (VMEM -> vreg -> VMEM, no per-row HBM traffic).
        for k in range(_ROWS_PER_ITER):
            r = r0 + k
            row = ids_ref[base + r]
            out_ref[pl.ds(r, 1), :] = table_ref[pl.ds(row, 1), :]
        return carry

    jax.lax.fori_loop(0, t // _ROWS_PER_ITER, body, 0)


def embedding_gather(token_rows, table, *, block_tokens=256):
    """Gather table[token_rows] with a Pallas kernel, T tokens per grid step.

    token_rows : int32 [N] row indices into `table` (already shifted/clipped)
    table      : float [V, D], D a multiple of 128
    returns    : [N, D]
    """
    n = token_rows.shape[0]
    v, d = table.shape
    assert d % 128 == 0, "embedding dim must be a multiple of 128"
    itemsize = jnp.dtype(table.dtype).itemsize
    table_bytes = v * d * itemsize

    # Table is pinned whole in VMEM.  Conservative budget so it also fits
    # v7x's 64 MiB VMEM with headroom for the double-buffered output tiles.
    # TODO(synk): for vocab tables larger than this, switch to an HBM-resident
    # table (memory_space=pl.ANY) with batched manual async-copy row gathers.
    assert table_bytes <= 40 * 1024 * 1024, "embedding table too large to pin in VMEM"

    # Sublane-dense (T, D) output tiles; T a multiple of 8.
    t = max(8, min(block_tokens, ((n + 7) // 8) * 8))
    n_pad = pl.cdiv(n, t) * t
    if n_pad != n:
        pad = jnp.zeros((n_pad - n,), dtype=token_rows.dtype)  # row 0 is always valid
        token_rows = jnp.concatenate([token_rows, pad])

    out_tile_bytes = t * d * itemsize
    vmem_limit = int(min(100 * 1024 * 1024,
                         max(32 * 1024 * 1024,
                             table_bytes + 4 * out_tile_bytes + (1 << 20))))

    grid_spec = pltpu.PrefetchScalarGridSpec(
        num_scalar_prefetch=1,                    # token rows land in SMEM
        grid=(n_pad // t,),
        in_specs=[
            # Full table, same block every step -> DMA'd once, stays resident.
            pl.BlockSpec((v, d), lambda i, ids: (0, 0)),
        ],
        out_specs=pl.BlockSpec((t, d), lambda i, ids: (i, 0)),
    )

    cost = pl.CostEstimate(
        flops=0,
        transcendentals=0,
        bytes_accessed=int(table_bytes + 2 * n_pad * d * itemsize),
    )

    out = pl.pallas_call(
        _gather_block_kernel,
        out_shape=jax.ShapeDtypeStruct((n_pad, d), table.dtype),
        grid_spec=grid_spec,
        compiler_params=pltpu.CompilerParams(
            # Each grid step writes a distinct output tile -> token axis is
            # embarrassingly parallel (lets v7x shard across both TCs).
            dimension_semantics=("parallel",),
            vmem_limit_bytes=vmem_limit,
        ),
        cost_estimate=cost,
    )(token_rows, table)
    return out[:n]


def base_ranker_encode(query_tok, doc_tok, vocab_embed):
    """JAX/Pallas equivalent of BaseRanker.encode.

    query_tok: int32 [B, Lq]
    doc_tok:   int32 [B, Ld]
    vocab_embed: float32 [V, D] frozen embedding table
    returns (q_emb [B, Lq, D], d_emb [B, Ld, D])
    """
    b, lq = query_tok.shape
    b2, ld = doc_tok.shape
    assert b == b2
    v, d = vocab_embed.shape

    q_flat = query_tok.reshape(-1).astype(jnp.int32)
    d_flat = doc_tok.reshape(-1).astype(jnp.int32)

    # Fused gather: one pallas_call for query + doc tokens.  Semantics match
    # embed(tok + 1); the clip only guards against OOB reads for ids that would
    # already be invalid in the reference module.
    rows = jnp.clip(jnp.concatenate([q_flat, d_flat]) + 1, 0, v - 1)
    emb = embedding_gather(rows, vocab_embed)

    q_emb = emb[: b * lq].reshape(b, lq, d)
    d_emb = emb[b * lq:].reshape(b, ld, d)
    return q_emb, d_emb


if __name__ == "__main__":
    key = jax.random.PRNGKey(0)
    k_tab, k_q, k_d = jax.random.split(key, 3)

    V, D = 32, 128           # vocab size, embedding dim
    B, LQ, LD = 2, 4, 8      # batch, query len, doc len

    # Deterministic "pretrained" vocab embedding (Embedding.from_pretrained).
    vocab_embed = jax.random.normal(k_tab, (V, D), dtype=jnp.float32)

    # Token ids in [0, V-2] so the +1 shift stays in range.
    query_tok = jax.random.randint(k_q, (B, LQ), 0, V - 1, dtype=jnp.int32)
    doc_tok = jax.random.randint(k_d, (B, LD), 0, V - 1, dtype=jnp.int32)

    q_emb, d_emb = base_ranker_encode(query_tok, doc_tok, vocab_embed)
    q_emb = jax.block_until_ready(q_emb)
    d_emb = jax.block_until_ready(d_emb)

    # Pure-JAX reference check (same semantics as torch embed(tok + 1)).
    q_ref = vocab_embed[query_tok + 1]
    d_ref = vocab_embed[doc_tok + 1]
    assert q_emb.shape == (B, LQ, D) and d_emb.shape == (B, LD, D)
    assert jnp.allclose(q_emb, q_ref), "query embedding mismatch"
    assert jnp.allclose(d_emb, d_ref), "doc embedding mismatch"

    print("KERNEL_OK")
</pallas_src>

<mosaic_0001>
module attributes {stable_mosaic.version = 11 : i64} {
  func.func @_gather_block_kernel(%arg0: i32, %arg1: memref<24xi32, #tpu.memory_space<smem>>, %arg2: memref<32x128xf32, #tpu.memory_space<vmem>>, %arg3: memref<24x128xf32, #tpu.memory_space<vmem>>) attributes {dimension_semantics = [#tpu.dimension_semantics<parallel>], iteration_bounds = array<i64: 1>, scalar_prefetch = 1 : i64, scratch_operands = 0 : i64, tpu.core_type = #tpu.core_type<tc>, window_params = [{pipeline_mode = #tpu.pipeline_mode<synchronous>, transform_indices = @transform_0, window_bounds = array<i64: 32, 128>}, {transform_indices = @transform_1, window_bounds = array<i64: 24, 128>}]} {
    %c24_i32 = arith.constant 24 : i32
    %0 = arith.muli %arg0, %c24_i32 : i32
    %1 = tpu.assume_multiple %0, 24 : i32
    %c0_i32 = arith.constant 0 : i32
    %c3_i32 = arith.constant 3 : i32
    %2 = arith.addi %c0_i32, %c3_i32 : i32
    %c1_i32 = arith.constant 1 : i32
    scf.for %arg4 = %c0_i32 to %2 step %c1_i32  : i32 {
      %c8_i32 = arith.constant 8 : i32
      %3 = arith.muli %arg4, %c8_i32 : i32
      %c0_i32_1 = arith.constant 0 : i32
      %4 = arith.addi %3, %c0_i32_1 : i32
      %5 = arith.addi %1, %4 : i32
      %6 = arith.index_cast %5 : i32 to index
      %7 = memref.load %arg1[%6] : memref<24xi32, #tpu.memory_space<smem>>
      %8 = arith.index_cast %7 : i32 to index
      %c0 = arith.constant 0 : index
      %9 = vector.load %arg2[%8, %c0] : memref<32x128xf32, #tpu.memory_space<vmem>>, vector<1x128xf32>
      %10 = arith.index_cast %4 : i32 to index
      %c0_2 = arith.constant 0 : index
      %11 = vector.load %arg3[%10, %c0_2] : memref<24x128xf32, #tpu.memory_space<vmem>>, vector<1x128xf32>
      tpu.vector_store %arg3[%10, %c0_2], %9 {strides = array<i32>} : memref<24x128xf32, #tpu.memory_space<vmem>>, vector<1x128xf32>,
      %c1_i32_3 = arith.constant 1 : i32
      %12 = arith.addi %3, %c1_i32_3 : i32
      %13 = arith.addi %1, %12 : i32
      %14 = arith.index_cast %13 : i32 to index
      %15 = memref.load %arg1[%14] : memref<24xi32, #tpu.memory_space<smem>>
      %16 = arith.index_cast %15 : i32 to index
      %c0_4 = arith.constant 0 : index
      %17 = vector.load %arg2[%16, %c0_4] : memref<32x128xf32, #tpu.memory_space<vmem>>, vector<1x128xf32>
      %18 = arith.index_cast %12 : i32 to index
      %c0_5 = arith.constant 0 : index
      %19 = vector.load %arg3[%18, %c0_5] : memref<24x128xf32, #tpu.memory_space<vmem>>, vector<1x128xf32>
      tpu.vector_store %arg3[%18, %c0_5], %17 {strides = array<i32>} : memref<24x128xf32, #tpu.memory_space<vmem>>, vector<1x128xf32>,
      %c2_i32 = arith.constant 2 : i32
      %20 = arith.addi %3, %c2_i32 : i32
      %21 = arith.addi %1, %20 : i32
      %22 = arith.index_cast %21 : i32 to index
      %23 = memref.load %arg1[%22] : memref<24xi32, #tpu.memory_space<smem>>
      %24 = arith.index_cast %23 : i32 to index
      %c0_6 = arith.constant 0 : index
      %25 = vector.load %arg2[%24, %c0_6] : memref<32x128xf32, #tpu.memory_space<vmem>>, vector<1x128xf32>
      %26 = arith.index_cast %20 : i32 to index
      %c0_7 = arith.constant 0 : index
      %27 = vector.load %arg3[%26, %c0_7] : memref<24x128xf32, #tpu.memory_space<vmem>>, vector<1x128xf32>
      tpu.vector_store %arg3[%26, %c0_7], %25 {strides = array<i32>} : memref<24x128xf32, #tpu.memory_space<vmem>>, vector<1x128xf32>,
      %c3_i32_8 = arith.constant 3 : i32
      %28 = arith.addi %3, %c3_i32_8 : i32
      %29 = arith.addi %1, %28 : i32
      %30 = arith.index_cast %29 : i32 to index
      %31 = memref.load %arg1[%30] : memref<24xi32, #tpu.memory_space<smem>>
      %32 = arith.index_cast %31 : i32 to index
      %c0_9 = arith.constant 0 : index
      %33 = vector.load %arg2[%32, %c0_9] : memref<32x128xf32, #tpu.memory_space<vmem>>, vector<1x128xf32>
      %34 = arith.index_cast %28 : i32 to index
      %c0_10 = arith.constant 0 : index
      %35 = vector.load %arg3[%34, %c0_10] : memref<24x128xf32, #tpu.memory_space<vmem>>, vector<1x128xf32>
      tpu.vector_store %arg3[%34, %c0_10], %33 {strides = array<i32>} : memref<24x128xf32, #tpu.memory_space<vmem>>, vector<1x128xf32>,
      %c4_i32 = arith.constant 4 : i32
      %36 = arith.addi %3, %c4_i32 : i32
      %37 = arith.addi %1, %36 : i32
      %38 = arith.index_cast %37 : i32 to index
      %39 = memref.load %arg1[%38] : memref<24xi32, #tpu.memory_space<smem>>
      %40 = arith.index_cast %39 : i32 to index
      %c0_11 = arith.constant 0 : index
      %41 = vector.load %arg2[%40, %c0_11] : memref<32x128xf32, #tpu.memory_space<vmem>>, vector<1x128xf32>
      %42 = arith.index_cast %36 : i32 to index
      %c0_12 = arith.constant 0 : index
      %43 = vector.load %arg3[%42, %c0_12] : memref<24x128xf32, #tpu.memory_space<vmem>>, vector<1x128xf32>
      tpu.vector_store %arg3[%42, %c0_12], %41 {strides = array<i32>} : memref<24x128xf32, #tpu.memory_space<vmem>>, vector<1x128xf32>,
      %c5_i32 = arith.constant 5 : i32
      %44 = arith.addi %3, %c5_i32 : i32
      %45 = arith.addi %1, %44 : i32
      %46 = arith.index_cast %45 : i32 to index
      %47 = memref.load %arg1[%46] : memref<24xi32, #tpu.memory_space<smem>>
      %48 = arith.index_cast %47 : i32 to index
      %c0_13 = arith.constant 0 : index
      %49 = vector.load %arg2[%48, %c0_13] : memref<32x128xf32, #tpu.memory_space<vmem>>, vector<1x128xf32>
      %50 = arith.index_cast %44 : i32 to index
      %c0_14 = arith.constant 0 : index
      %51 = vector.load %arg3[%50, %c0_14] : memref<24x128xf32, #tpu.memory_space<vmem>>, vector<1x128xf32>
      tpu.vector_store %arg3[%50, %c0_14], %49 {strides = array<i32>} : memref<24x128xf32, #tpu.memory_space<vmem>>, vector<1x128xf32>,
      %c6_i32 = arith.constant 6 : i32
      %52 = arith.addi %3, %c6_i32 : i32
      %53 = arith.addi %1, %52 : i32
      %54 = arith.index_cast %53 : i32 to index
      %55 = memref.load %arg1[%54] : memref<24xi32, #tpu.memory_space<smem>>
      %56 = arith.index_cast %55 : i32 to index
      %c0_15 = arith.constant 0 : index
      %57 = vector.load %arg2[%56, %c0_15] : memref<32x128xf32, #tpu.memory_space<vmem>>, vector<1x128xf32>
      %58 = arith.index_cast %52 : i32 to index
      %c0_16 = arith.constant 0 : index
      %59 = vector.load %arg3[%58, %c0_16] : memref<24x128xf32, #tpu.memory_space<vmem>>, vector<1x128xf32>
      tpu.vector_store %arg3[%58, %c0_16], %57 {strides = array<i32>} : memref<24x128xf32, #tpu.memory_space<vmem>>, vector<1x128xf32>,
      %c7_i32 = arith.constant 7 : i32
      %60 = arith.addi %3, %c7_i32 : i32
      %61 = arith.addi %1, %60 : i32
      %62 = arith.index_cast %61 : i32 to index
      %63 = memref.load %arg1[%62] : memref<24xi32, #tpu.memory_space<smem>>
      %64 = arith.index_cast %63 : i32 to index
      %c0_17 = arith.constant 0 : index
      %65 = vector.load %arg2[%64, %c0_17] : memref<32x128xf32, #tpu.memory_space<vmem>>, vector<1x128xf32>
      %66 = arith.index_cast %60 : i32 to index
      %c0_18 = arith.constant 0 : index
      %67 = vector.load %arg3[%66, %c0_18] : memref<24x128xf32, #tpu.memory_space<vmem>>, vector<1x128xf32>
      tpu.vector_store %arg3[%66, %c0_18], %65 {strides = array<i32>} : memref<24x128xf32, #tpu.memory_space<vmem>>, vector<1x128xf32>,
    }
    %c3_i32_0 = arith.constant 3 : i32
    return
  }
  func.func @transform_0(%arg0: i32, %arg1: memref<24xi32, #tpu.memory_space<smem>>) -> (i32, i32) {
    %c0_i32 = arith.constant 0 : i32
    %c0_i32_0 = arith.constant 0 : i32
    %c0_i32_1 = arith.constant 0 : i32
    return %c0_i32, %c0_i32_0 : i32, i32
  }
  func.func @transform_1(%arg0: i32, %arg1: memref<24xi32, #tpu.memory_space<smem>>) -> (i32, i32) {
    %c0_i32 = arith.constant 0 : i32
    %c0_i32_0 = arith.constant 0 : i32
    return %arg0, %c0_i32 : i32, i32
  }
}

</mosaic_0001>

<llo_original>
// kernel: tpu_custom_call.1
$region0: #{tpu_custom_call.1}
  #allocation0 [shape = 'u32[]', space=smem, size = 0x4, offset = 0x4, fixed_abs, tag = 'smem constant byte address 0x4 - core index']
  #allocation1 [shape = 'u32[144,128]{1,0:T(1,128)}', space=vmem, size = 0x12000, scoped, tag = 'internal scratch']
  #allocation2 [shape = 's32[1]{0}', space=sflag, size = 0x4, scoped, tag = 'scoped memory for tpu_custom_call.1']
  #allocation3 [shape = 'u8[512]{0}', space=smem, size = 0x200, scoped, tag = 'prefetched SMEM operand 0']
  %s0 = inlined_call_operand.hbm [shape: s32[24], index: 0, kind: input, shape index: {}]
  %s1 = inlined_call_operand.hbm [shape: f32[32,128], index: 1, kind: input, shape index: {}]
  %s2 = inlined_call_operand.hbm [shape: f32[24,128], index: 2, kind: output, shape index: {}]
  %s3 = sld [smem:[#allocation0]]
  $region25: #{tpu_custom_call.1} parent=0
    _
  %s5 = ssub.s32 1, %s3
  %s6 = scalar_select 0, %s5, %s3
  %8 = dma.hbm_to_smem %s0, 16, [#allocation3], [#allocation2]
  %9 = dma.done [#allocation2], 16
  %10 = sfence
  $region1: #{tpu_custom_call.1} parent=0
    #allocation4 [shape = 'u8[16384]{0}', space=vmem, size = 0x4000, scoped, tag = 'input window, operand 1, single buffered']
    #allocation5 [shape = 's32[1]{0}', space=sflag, size = 0x4, scoped, tag = 'scoped memory for tpu_custom_call.1']
    #allocation6 [shape = 's32[1]{0}', space=sflag, size = 0x4, scoped, tag = 'scoped memory for tpu_custom_call.1']
    #allocation7 [shape = 'u8[12288]{0}', space=vmem, size = 0x3000, scoped, tag = 'output window, operand 0, single buffered']
    %11 = vsyncpa [#allocation5], 0
    %12 = vsyncpa [#allocation6], 0
    // Predicated region
    $region2: #{tpu_custom_call.1} parent=1 // pred_check
      _
    $region3: #{tpu_custom_call.1} parent=1 // pred_check_branch
      %14 = sbr.rel (0) target = $region5
    $region4: #{tpu_custom_call.1} parent=1 // pred_region
      %s16 = ssub.s32 512, 512
      %17 = vsyncadd [#allocation5], %s16
      %s18 = sshll.u32 [#allocation4], 4
      %s19 = int_to_ptr.vmem [resolvable:$true] %s18
      %24 = dma.hbm_to_vmem [thread:$0]  %s1, 512, %s19, [#allocation5], 128, 128, 8
    $region5: #{tpu_custom_call.1} parent=1 // pred_fallthru
      _
    // Predicated region
    $region6: #{tpu_custom_call.1} parent=1 // pred_check
      _
    $region7: #{tpu_custom_call.1} parent=1 // pred_check_branch
      %26 = sbr.rel (0) target = $region9
    $region8: #{tpu_custom_call.1} parent=1 // pred_region
      %27 = dma.done [#allocation5], 512
    $region9: #{tpu_custom_call.1} parent=1 // pred_fallthru
      _
    %s28 = smul.u32 0, 24
    loop: start=0, step=1, limit=3
    $region10: #{tpu_custom_call.1} parent=1 // loop_pre_header
      _
    $region11: #{tpu_custom_call.1} parent=1 // loop_header
      %s30 = sphi 0, %s34
      %p31 = scmp.ge.s32.totalorder %s30, 3
    $region12: #{tpu_custom_call.1} parent=1 // loop_header_branch
      %33 = sbr.rel (%p31) target = $region16
    $region13: #{tpu_custom_call.1} parent=1 // loop_body
      %s35 = smul.u32 %s30, 8
      %s36 = sadd.s32 %s28, %s35
      %s37 = sld [smem:[#allocation3 + %s36]]
      %s38 = scalar_lea.vmem [#allocation4], %s37
      %v39 = vld [vmem:[%s38] sm:$0x1]
      %s40 = scalar_lea.vmem [#allocation7], %s35
      %41 = vst [vmem:[%s40] sm:$0x1] %v39
      %s42 = sadd.s32 %s35, 1
      %s43 = sadd.s32 %s28, %s42
      %s44 = sld [smem:[#allocation3 + %s43]]
      %s45 = scalar_lea.vmem [#allocation4], %s44
      %v46 = vld [vmem:[%s45] sm:$0x1]
      %s47 = scalar_lea.vmem [#allocation7], %s42
      %48 = vst [vmem:[%s47] sm:$0x1] %v46
      %s49 = sadd.s32 %s35, 2
      %s50 = sadd.s32 %s28, %s49
      %s51 = sld [smem:[#allocation3 + %s50]]
      %s52 = scalar_lea.vmem [#allocation4], %s51
      %v53 = vld [vmem:[%s52] sm:$0x1]
      %s54 = scalar_lea.vmem [#allocation7], %s49
      %55 = vst [vmem:[%s54] sm:$0x1] %v53
      %s56 = sadd.s32 %s35, 3
      %s57 = sadd.s32 %s28, %s56
      %s58 = sld [smem:[#allocation3 + %s57]]
      %s59 = scalar_lea.vmem [#allocation4], %s58
      %v60 = vld [vmem:[%s59] sm:$0x1]
      %s61 = scalar_lea.vmem [#allocation7], %s56
      %62 = vst [vmem:[%s61] sm:$0x1] %v60
      %s63 = sadd.s32 %s35, 4
      %s64 = sadd.s32 %s28, %s63
      %s65 = sld [smem:[#allocation3 + %s64]]
      %s66 = scalar_lea.vmem [#allocation4], %s65
      %v67 = vld [vmem:[%s66] sm:$0x1]
      %s68 = scalar_lea.vmem [#allocation7], %s63
      %69 = vst [vmem:[%s68] sm:$0x1] %v67
      %s70 = sadd.s32 %s35, 5
      %s71 = sadd.s32 %s28, %s70
      %s72 = sld [smem:[#allocation3 + %s71]]
      %s73 = scalar_lea.vmem [#allocation4], %s72
      %v74 = vld [vmem:[%s73] sm:$0x1]
      %s75 = scalar_lea.vmem [#allocation7], %s70
      %76 = vst [vmem:[%s75] sm:$0x1] %v74
      %s77 = sadd.s32 %s35, 6
      %s78 = sadd.s32 %s28, %s77
      %s79 = sld [smem:[#allocation3 + %s78]]
      %s80 = scalar_lea.vmem [#allocation4], %s79
      %v81 = vld [vmem:[%s80] sm:$0x1]
      %s82 = scalar_lea.vmem [#allocation7], %s77
      %83 = vst [vmem:[%s82] sm:$0x1] %v81
      %s84 = sadd.s32 %s35, 7
      %s85 = sadd.s32 %s28, %s84
      %s86 = sld [smem:[#allocation3 + %s85]]
      %s87 = scalar_lea.vmem [#allocation4], %s86
      %v88 = vld [vmem:[%s87] sm:$0x1]
      %s89 = scalar_lea.vmem [#allocation7], %s84
      %90 = vst [vmem:[%s89] sm:$0x1] %v88
    $region14: #{tpu_custom_call.1} parent=1 // loop_footer
      %s34 = sadd.s32 1, %s30
    $region15: #{tpu_custom_call.1} parent=1 // loop_footer_branch
      %29 = sbr.rel target = $region11
    $region16: #{tpu_custom_call.1} parent=1 // loop_exit
      _
    // Predicated region
    $region17: #{tpu_custom_call.1} parent=1 // pred_check
      _
    $region18: #{tpu_custom_call.1} parent=1 // pred_check_branch
      %92 = sbr.rel (0) target = $region20
    $region19: #{tpu_custom_call.1} parent=1 // pred_region
      %s94 = ssub.s32 384, 384
      %95 = vsyncadd [#allocation6], %s94
      %s96 = sshll.u32 [#allocation7], 4
      %s97 = int_to_ptr.vmem [resolvable:$true] %s96
      %102 = dma.vmem_to_hbm [thread:$0]  %s97, 384, %s2, [#allocation6], 128, 128, 8
    $region20: #{tpu_custom_call.1} parent=1 // pred_fallthru
      _
    // Predicated region
    $region21: #{tpu_custom_call.1} parent=1 // pred_check
      _
    $region22: #{tpu_custom_call.1} parent=1 // pred_check_branch
      %104 = sbr.rel (0) target = $region24
    $region23: #{tpu_custom_call.1} parent=1 // pred_region
      %105 = dma.done [#allocation6], 384
    $region24: #{tpu_custom_call.1} parent=1 // pred_fallthru
      _
    %106 = vsyncpa [#allocation5], 1
    %107 = vsyncpa [#allocation6], 1

</llo_original>
